<compile_context>
chip_gen: v5e
topology: v5e:2x2
jax: 0.10.0
libtpu: 0.0.40
codegen_flags: <defaults>
</compile_context>

<pallas_src>
import jax
import jax.numpy as jnp
from jax.experimental import pallas as pl
from jax.experimental.pallas import tpu as pltpu


def _round_up(v, m):
    return -(-v // m) * m


def _make_kernel(hw_true, t_hw, needs_mask):
    n_chunks = t_hw // 128
    inv_hw = 1.0 / float(hw_true)

    def kernel(x_ref, w1_ref, b1_ref, w2_ref, b2_ref, out_ref, acc_ref):
        # x_ref : (B, C, t_hw) tile of the flattened feature map (streamed)
        # w1_ref: (C, 512)      b1_ref: (1, 512)
        # w2_ref: (512, S*L)    b2_ref: (1, S*L)
        # out_ref: (B, S*L)     acc_ref: (B, C, 128) f32 lane-partial sums
        step = pl.program_id(0)

        @pl.when(step == 0)
        def _():
            acc_ref[...] = jnp.zeros_like(acc_ref)

        if needs_mask:
            # Hoisted lane iota (built once per step, reused for every chunk).
            lane = jax.lax.broadcasted_iota(
                jnp.int32, (x_ref.shape[0], x_ref.shape[1], 128), 2)
            base = step * t_hw

        def load_chunk(c):
            v = x_ref[:, :, c * 128:(c + 1) * 128].astype(jnp.float32)
            if needs_mask:
                # Zero lanes past the true spatial extent (partial last tile).
                v = jnp.where(lane < (hw_true - base - c * 128), v, 0.0)
            return v

        # Pure-VPU lane-partial accumulation (no XLU reduce in the hot loop).
        partial = load_chunk(0)
        for c in range(1, n_chunks):
            partial = partial + load_chunk(c)
        acc_ref[...] += partial

        @pl.when(step == pl.num_programs(0) - 1)
        def _():
            # Single cross-lane reduce + relayout + tiny MLP, once.
            pooled = jnp.sum(acc_ref[...], axis=-1) * inv_hw          # (B, C)
            h = jnp.dot(pooled, w1_ref[...],
                        preferred_element_type=jnp.float32) + b1_ref[...]
            h = jnp.maximum(h, 0.0)                                   # ReLU
            y = jnp.dot(h, w2_ref[...],
                        preferred_element_type=jnp.float32) + b2_ref[...]
            out_ref[...] = y.astype(out_ref.dtype)

    return kernel


def feature_to_style(x, w1, b1, w2, b2, num_styles, latent_dim):
    """x: (B, C, H, W) float32 -> (num_styles, B, latent_dim) float32."""
    B, C, H, W = x.shape
    hidden = w1.shape[1]
    out_dim = num_styles * latent_dim
    HW = H * W

    # Free view: contiguous trailing-dim collapse, no HBM copy (no jnp.pad).
    x2 = x.reshape(B, C, HW)

    C_pad = _round_up(C, 8)

    # ---- generation-aware VMEM capacity (v5e/v6e 128 MiB, v7x 64 MiB) ----
    try:
        vmem_cap = int(pltpu.get_tpu_info().vmem_capacity_bytes)
    except Exception:
        vmem_cap = 64 * 1024 * 1024          # conservative (v7x) fallback

    def _blk_bytes(r, c_):                   # (8,128)-padded f32 block
        return _round_up(max(r, 1), 8) * _round_up(max(c_, 1), 128) * 4

    # Resident blocks: the pipeline double-buffers every input/output block.
    fixed = 2 * (_blk_bytes(C, hidden) + _blk_bytes(1, hidden)
                 + _blk_bytes(hidden, out_dim) + _blk_bytes(1, out_dim)
                 + _blk_bytes(B, out_dim))
    fixed += B * C_pad * 128 * 4             # accumulator scratch (one copy)

    # Streamed x tile: double-buffered, sublane-padded.
    bytes_per_lane = 2 * B * C_pad * 4
    budget = int(vmem_cap * 0.8) - fixed - (4 << 20)
    budget = max(budget, bytes_per_lane * 128)
    t_hw_budget = max(128, (budget // bytes_per_lane) // 128 * 128)

    T_HW_CAP = 8192                          # keeps the chunk unroll <= 64
    t_hw = min(_round_up(HW, 128), T_HW_CAP, t_hw_budget)
    n_steps = -(-HW // t_hw)
    needs_mask = (HW % t_hw) != 0            # ragged last tile masked in-kernel

    needed = fixed + bytes_per_lane * t_hw + (4 << 20)
    vmem_limit = int(min(max(needed, 16 << 20), int(vmem_cap * 0.95)))

    cost = pl.CostEstimate(
        flops=B * C * HW + 2 * B * C * hidden + 2 * B * hidden * out_dim,
        transcendentals=0,
        bytes_accessed=(B * C * HW * 4 + C * hidden * 4 + hidden * 4
                        + hidden * out_dim * 4 + out_dim * 4 + B * out_dim * 4),
    )

    out = pl.pallas_call(
        _make_kernel(HW, t_hw, needs_mask),
        out_shape=jax.ShapeDtypeStruct((B, out_dim), jnp.float32),
        grid=(n_steps,),
        in_specs=[
            pl.BlockSpec((B, C, t_hw), lambda s: (0, 0, s)),    # streamed x
            pl.BlockSpec((C, hidden), lambda s: (0, 0)),        # resident w1
            pl.BlockSpec((1, hidden), lambda s: (0, 0)),        # resident b1
            pl.BlockSpec((hidden, out_dim), lambda s: (0, 0)),  # resident w2
            pl.BlockSpec((1, out_dim), lambda s: (0, 0)),       # resident b2
        ],
        out_specs=pl.BlockSpec((B, out_dim), lambda s: (0, 0)),
        scratch_shapes=[pltpu.VMEM((B, C, 128), jnp.float32)],
        compiler_params=pltpu.CompilerParams(
            dimension_semantics=("arbitrary",),
            vmem_limit_bytes=vmem_limit,
        ),
        cost_estimate=cost,
    )(x2, w1, b1, w2, b2)

    # view(B, S, L).permute(1, 0, 2) -> (S, B, L): pure layout glue.
    return out.reshape(B, num_styles, latent_dim).transpose(1, 0, 2)


def init_params(key, in_channels, num_styles, latent_dim, hidden=512):
    """Deterministic init matching PyTorch Linear shapes (stored transposed
    so the kernel can do x @ W directly)."""
    k1, k2, k3, k4 = jax.random.split(key, 4)
    bound1 = 1.0 / (in_channels ** 0.5)
    bound2 = 1.0 / (hidden ** 0.5)
    w1 = jax.random.uniform(k1, (in_channels, hidden), jnp.float32,
                            minval=-bound1, maxval=bound1)
    b1 = jax.random.uniform(k2, (1, hidden), jnp.float32,
                            minval=-bound1, maxval=bound1)
    w2 = jax.random.uniform(k3, (hidden, num_styles * latent_dim), jnp.float32,
                            minval=-bound2, maxval=bound2)
    b2 = jax.random.uniform(k4, (1, num_styles * latent_dim), jnp.float32,
                            minval=-bound2, maxval=bound2)
    return w1, b1, w2, b2


if __name__ == "__main__":
    # Small shapes consistent with the module's forward.
    B, C, H, W = 2, 4, 16, 16
    num_styles, latent_dim = 4, 8

    key = jax.random.PRNGKey(0)
    kx, kp = jax.random.split(key)
    x = jax.random.normal(kx, (B, C, H, W), jnp.float32)
    w1, b1, w2, b2 = init_params(kp, C, num_styles, latent_dim)

    out = feature_to_style(x, w1, b1, w2, b2, num_styles, latent_dim)
    out = jax.block_until_ready(out)

    # Pure-JAX reference for sanity.
    pooled = jnp.mean(x, axis=(2, 3))                      # (B, C)
    h = jnp.maximum(pooled @ w1 + b1, 0.0)                 # (B, 512)
    ref = (h @ w2 + b2).reshape(B, num_styles, latent_dim).transpose(1, 0, 2)

    assert out.shape == (num_styles, B, latent_dim), out.shape
    assert jnp.allclose(out, ref, atol=1e-5, rtol=1e-5)
    print("KERNEL_OK")
</pallas_src>

<mosaic_0001>
module attributes {stable_mosaic.version = 11 : i64} {
  func.func @kernel(%arg0: i32, %arg1: memref<2x4x256xf32, #tpu.memory_space<vmem>>, %arg2: memref<4x512xf32, #tpu.memory_space<vmem>>, %arg3: memref<1x512xf32, #tpu.memory_space<vmem>>, %arg4: memref<512x32xf32, #tpu.memory_space<vmem>>, %arg5: memref<1x32xf32, #tpu.memory_space<vmem>>, %arg6: memref<2x32xf32, #tpu.memory_space<vmem>>, %arg7: memref<2x4x128xf32, #tpu.memory_space<vmem>>) attributes {dimension_semantics = [#tpu.dimension_semantics<arbitrary>], iteration_bounds = array<i64: 1>, scalar_prefetch = 0 : i64, scratch_operands = 1 : i64, tpu.core_type = #tpu.core_type<tc>, window_params = [{transform_indices = @transform_0, window_bounds = array<i64: 2, 4, 256>}, {pipeline_mode = #tpu.pipeline_mode<synchronous>, transform_indices = @transform_1, window_bounds = array<i64: 4, 512>}, {pipeline_mode = #tpu.pipeline_mode<synchronous>, transform_indices = @transform_2, window_bounds = array<i64: 1, 512>}, {pipeline_mode = #tpu.pipeline_mode<synchronous>, transform_indices = @transform_3, window_bounds = array<i64: 512, 32>}, {pipeline_mode = #tpu.pipeline_mode<synchronous>, transform_indices = @transform_4, window_bounds = array<i64: 1, 32>}, {pipeline_mode = #tpu.pipeline_mode<synchronous>, transform_indices = @transform_5, window_bounds = array<i64: 2, 32>}]} {
    %c0_i32 = arith.constant 0 : i32
    %0 = arith.cmpi eq, %arg0, %c0_i32 : i32
    %1 = arith.extui %0 : i1 to i32
    %c0_i32_0 = arith.constant 0 : i32
    %2 = arith.cmpi ne, %1, %c0_i32_0 : i32
    scf.if %2 {
      %cst = arith.constant 0.000000e+00 : f32
      %12 = vector.broadcast %cst : f32 to vector<2x4x128xf32>
      %c0_13 = arith.constant 0 : index
      %c0_14 = arith.constant 0 : index
      %c0_15 = arith.constant 0 : index
      %13 = vector.load %arg7[%c0_13, %c0_14, %c0_15] : memref<2x4x128xf32, #tpu.memory_space<vmem>>, vector<2x4x128xf32>
      tpu.vector_store %arg7[%c0_13, %c0_14, %c0_15], %12 {strides = array<i32>} : memref<2x4x128xf32, #tpu.memory_space<vmem>>, vector<2x4x128xf32>,
    } else {
    }
    %c0 = arith.constant 0 : index
    %c0_1 = arith.constant 0 : index
    %c0_2 = arith.constant 0 : index
    %3 = vector.load %arg1[%c0, %c0_1, %c0_2] : memref<2x4x256xf32, #tpu.memory_space<vmem>>, vector<2x4x128xf32>
    %c0_3 = arith.constant 0 : index
    %c0_4 = arith.constant 0 : index
    %c128 = arith.constant 128 : index
    %4 = vector.load %arg1[%c0_3, %c0_4, %c128] : memref<2x4x256xf32, #tpu.memory_space<vmem>>, vector<2x4x128xf32>
    %5 = arith.addf %3, %4 : vector<2x4x128xf32>
    %c0_5 = arith.constant 0 : index
    %c0_6 = arith.constant 0 : index
    %c0_7 = arith.constant 0 : index
    %6 = vector.load %arg7[%c0_5, %c0_6, %c0_7] : memref<2x4x128xf32, #tpu.memory_space<vmem>>, vector<2x4x128xf32>
    %7 = arith.addf %6, %5 : vector<2x4x128xf32>
    %c0_8 = arith.constant 0 : index
    %c0_9 = arith.constant 0 : index
    %c0_10 = arith.constant 0 : index
    %8 = vector.load %arg7[%c0_8, %c0_9, %c0_10] : memref<2x4x128xf32, #tpu.memory_space<vmem>>, vector<2x4x128xf32>
    tpu.vector_store %arg7[%c0_8, %c0_9, %c0_10], %7 {strides = array<i32>} : memref<2x4x128xf32, #tpu.memory_space<vmem>>, vector<2x4x128xf32>,
    %c0_i32_11 = arith.constant 0 : i32
    %9 = arith.cmpi eq, %arg0, %c0_i32_11 : i32
    %10 = arith.extui %9 : i1 to i32
    %c0_i32_12 = arith.constant 0 : i32
    %11 = arith.cmpi ne, %10, %c0_i32_12 : i32
    scf.if %11 {
      %c0_13 = arith.constant 0 : index
      %c0_14 = arith.constant 0 : index
      %c0_15 = arith.constant 0 : index
      %12 = vector.load %arg7[%c0_13, %c0_14, %c0_15] : memref<2x4x128xf32, #tpu.memory_space<vmem>>, vector<2x4x128xf32>
      %cst = arith.constant dense<0.000000e+00> : vector<2x4xf32>
      %13 = vector.multi_reduction <add>, %12, %cst [2] : vector<2x4x128xf32> to vector<2x4xf32>
      %cst_16 = arith.constant 3.906250e-03 : f32
      %14 = vector.broadcast %cst_16 : f32 to vector<2x4xf32>
      %15 = arith.mulf %13, %14 : vector<2x4xf32>
      %c0_17 = arith.constant 0 : index
      %c0_18 = arith.constant 0 : index
      %16 = vector.load %arg2[%c0_17, %c0_18] : memref<4x512xf32, #tpu.memory_space<vmem>>, vector<4x512xf32>
      %cst_19 = arith.constant dense<0.000000e+00> : vector<2x512xf32>
      %17 = tpu.matmul %15, %16, %cst_19 {dimension_numbers = #tpu.dot_dimension_numbers<[1], [0], [0], [1], [0, 0, 1, 1], [], []>} : vector<2x4xf32>, vector<4x512xf32>, vector<2x512xf32> -> vector<2x512xf32>
      %c0_20 = arith.constant 0 : index
      %c0_21 = arith.constant 0 : index
      %18 = vector.load %arg3[%c0_20, %c0_21] : memref<1x512xf32, #tpu.memory_space<vmem>>, vector<1x512xf32>
      %19 = vector.broadcast %18 : vector<1x512xf32> to vector<2x512xf32>
      %20 = arith.addf %17, %19 : vector<2x512xf32>
      %cst_22 = arith.constant 0.000000e+00 : f32
      %21 = vector.broadcast %cst_22 : f32 to vector<2x512xf32>
      %22 = arith.maximumf %20, %21 : vector<2x512xf32>
      %c0_23 = arith.constant 0 : index
      %c0_24 = arith.constant 0 : index
      %23 = vector.load %arg4[%c0_23, %c0_24] : memref<512x32xf32, #tpu.memory_space<vmem>>, vector<512x32xf32>
      %cst_25 = arith.constant dense<0.000000e+00> : vector<2x32xf32>
      %24 = tpu.matmul %22, %23, %cst_25 {dimension_numbers = #tpu.dot_dimension_numbers<[1], [0], [0], [1], [0, 0, 1, 1], [], []>} : vector<2x512xf32>, vector<512x32xf32>, vector<2x32xf32> -> vector<2x32xf32>
      %c0_26 = arith.constant 0 : index
      %c0_27 = arith.constant 0 : index
      %25 = vector.load %arg5[%c0_26, %c0_27] : memref<1x32xf32, #tpu.memory_space<vmem>>, vector<1x32xf32>
      %26 = vector.broadcast %25 : vector<1x32xf32> to vector<2x32xf32>
      %27 = arith.addf %24, %26 : vector<2x32xf32>
      %c0_28 = arith.constant 0 : index
      %c0_29 = arith.constant 0 : index
      %28 = vector.load %arg6[%c0_28, %c0_29] : memref<2x32xf32, #tpu.memory_space<vmem>>, vector<2x32xf32>
      tpu.vector_store %arg6[%c0_28, %c0_29], %27 {strides = array<i32>} : memref<2x32xf32, #tpu.memory_space<vmem>>, vector<2x32xf32>,
    } else {
    }
    return
  }
  func.func @transform_0(%arg0: i32) -> (i32, i32, i32) {
    %c0_i32 = arith.constant 0 : i32
    %c0_i32_0 = arith.constant 0 : i32
    %c0_i32_1 = arith.constant 0 : i32
    return %c0_i32, %c0_i32_0, %arg0 : i32, i32, i32
  }
  func.func @transform_1(%arg0: i32) -> (i32, i32) {
    %c0_i32 = arith.constant 0 : i32
    %c0_i32_0 = arith.constant 0 : i32
    %c0_i32_1 = arith.constant 0 : i32
    return %c0_i32, %c0_i32_0 : i32, i32
  }
  func.func @transform_2(%arg0: i32) -> (i32, i32) {
    %c0_i32 = arith.constant 0 : i32
    %c0_i32_0 = arith.constant 0 : i32
    %c0_i32_1 = arith.constant 0 : i32
    return %c0_i32, %c0_i32_0 : i32, i32
  }
  func.func @transform_3(%arg0: i32) -> (i32, i32) {
    %c0_i32 = arith.constant 0 : i32
    %c0_i32_0 = arith.constant 0 : i32
    %c0_i32_1 = arith.constant 0 : i32
    return %c0_i32, %c0_i32_0 : i32, i32
  }
  func.func @transform_4(%arg0: i32) -> (i32, i32) {
    %c0_i32 = arith.constant 0 : i32
    %c0_i32_0 = arith.constant 0 : i32
    %c0_i32_1 = arith.constant 0 : i32
    return %c0_i32, %c0_i32_0 : i32, i32
  }
  func.func @transform_5(%arg0: i32) -> (i32, i32) {
    %c0_i32 = arith.constant 0 : i32
    %c0_i32_0 = arith.constant 0 : i32
    %c0_i32_1 = arith.constant 0 : i32
    return %c0_i32, %c0_i32_0 : i32, i32
  }
}

</mosaic_0001>

<llo_original>
// kernel: tpu_custom_call.1
$region0: #{tpu_custom_call.1}
  #allocation0 [shape = 'u32[]', space=smem, size = 0x4, offset = 0x4, fixed_abs, tag = 'smem constant byte address 0x4 - core index']
  #allocation1 [shape = 'u32[72,128]{1,0:T(1,128)}', space=vmem, size = 0x9000, scoped, tag = 'internal scratch']
  #allocation2 [shape = 'f32[2,4,128]{2,1,0:T(4,128)}', space=vmem, size = 0x1000, scoped, tag = 'scratch operand']
  %s0 = inlined_call_operand.vmem [shape: f32[2,4,256], index: 0, kind: input, shape index: {}]
  %s1 = inlined_call_operand.vmem [shape: f32[4,512], index: 1, kind: input, shape index: {}]
  %s2 = inlined_call_operand.vmem [shape: f32[1,512], index: 2, kind: input, shape index: {}]
  %s3 = inlined_call_operand.vmem [shape: f32[512,32], index: 3, kind: input, shape index: {}]
  %s4 = inlined_call_operand.vmem [shape: f32[1,32], index: 4, kind: input, shape index: {}]
  %s5 = inlined_call_operand.hbm [shape: f32[2,32], index: 5, kind: output, shape index: {}]
  %s6 = sld [smem:[#allocation0]]
  $region38: #{tpu_custom_call.1} parent=0
    _
  %s8 = ssub.s32 1, %s6
  %s9 = scalar_select 0, %s8, %s6
  $region1: #{tpu_custom_call.1} parent=0
    #allocation3 [shape = 'u8[1024]{0}', space=vmem, size = 0x400, scoped, tag = 'output window, operand 0, single buffered']
    #allocation4 [shape = 's32[1]{0}', space=sflag, size = 0x4, scoped, tag = 'scoped memory for tpu_custom_call.1']
    %10 = vsyncpa [#allocation4], 0
    // Predicated region
    $region2: #{tpu_custom_call.1} parent=1 // pred_check
      _
    $region3: #{tpu_custom_call.1} parent=1 // pred_check_branch
      %12 = sbr.rel (0) target = $region5
    $region4: #{tpu_custom_call.1} parent=1 // pred_region
      _
    $region5: #{tpu_custom_call.1} parent=1 // pred_fallthru
      _
    // Predicated region
    $region6: #{tpu_custom_call.1} parent=1 // pred_check
      _
    $region7: #{tpu_custom_call.1} parent=1 // pred_check_branch
      %14 = sbr.rel (0) target = $region9
    $region8: #{tpu_custom_call.1} parent=1 // pred_region
      _
    $region9: #{tpu_custom_call.1} parent=1 // pred_fallthru
      _
    // Predicated region
    $region10: #{tpu_custom_call.1} parent=1 // pred_check
      _
    $region11: #{tpu_custom_call.1} parent=1 // pred_check_branch
      %16 = sbr.rel (0) target = $region13
    $region12: #{tpu_custom_call.1} parent=1 // pred_region
      _
    $region13: #{tpu_custom_call.1} parent=1 // pred_fallthru
      _
    // Predicated region
    $region14: #{tpu_custom_call.1} parent=1 // pred_check
      _
    $region15: #{tpu_custom_call.1} parent=1 // pred_check_branch
      %18 = sbr.rel (0) target = $region17
    $region16: #{tpu_custom_call.1} parent=1 // pred_region
      _
    $region17: #{tpu_custom_call.1} parent=1 // pred_fallthru
      _
    // Predicated region
    $region18: #{tpu_custom_call.1} parent=1 // pred_check
      _
    $region19: #{tpu_custom_call.1} parent=1 // pred_check_branch
      %20 = sbr.rel (0) target = $region21
    $region20: #{tpu_custom_call.1} parent=1 // pred_region
      _
    $region21: #{tpu_custom_call.1} parent=1 // pred_fallthru
      _
    %p21 = scmp.eq.s32.totalorder 0, 0
    // Predicated region
    $region22: #{tpu_custom_call.1} parent=1 // pred_check
      %p22 = pneg %p21
    $region23: #{tpu_custom_call.1} parent=1 // pred_check_branch
      %24 = sbr.rel (%p22) target = $region25
    $region24: #{tpu_custom_call.1} parent=1 // pred_region
      %25 = vst [vmem:[#allocation2] sm:$0xf] 0.0
      %26 = vst [vmem:[#allocation2 + $0x4] sm:$0xf] 0.0
    $region25: #{tpu_custom_call.1} parent=1 // pred_fallthru
      _
    %v27 = vld [vmem:[%s0] sm:$0xf]
    %v28 = vld [vmem:[%s0 + $0x8] sm:$0xf]
    %v29 = vld [vmem:[%s0 + $0x4] sm:$0xf]
    %v30 = vld [vmem:[%s0 + $0xc] sm:$0xf]
    %v31 = vadd.f32 %v27, %v29
    %v32 = vadd.f32 %v28, %v30
    %v33 = vld [vmem:[#allocation2] sm:$0xf]
    %v34 = vld [vmem:[#allocation2 + $0x4] sm:$0xf]
    %v35 = vadd.f32 %v33, %v31
    %v36 = vadd.f32 %v34, %v32
    %37 = vst [vmem:[#allocation2] sm:$0xf] %v35
    %38 = vst [vmem:[#allocation2 + $0x4] sm:$0xf] %v36
    // Predicated region
    $region26: #{tpu_custom_call.1} parent=1 // pred_check
      %p39 = pneg %p21
    $region27: #{tpu_custom_call.1} parent=1 // pred_check_branch
      %41 = sbr.rel (%p39) target = $region29
    $region28: #{tpu_custom_call.1} parent=1 // pred_region
      %v42 = vld [vmem:[#allocation2] sm:$0xf]
      %v43 = vld [vmem:[#allocation2 + $0x4] sm:$0xf]
      %vm44 = vcmask 1043456
      %v45 = vsel %vm44, %v42, 0.0
      %46 = vadd.xlane.f32.xlu0 %v45
      %v47 = vpop.xlane.xlu0 %46
      %v48 = vsel %vm44, %v43, 0.0
      %49 = vadd.xlane.f32.xlu0 %v48
      %v50 = vpop.xlane.xlu0 %49
      %v51 = vmul.f32 %v47, 0.00390625
      %v52 = vmul.f32 %v50, 0.00390625
      %v53 = vld [vmem:[%s1] sm:$0xff]
      %v54 = vld [vmem:[%s1 + $0x8] sm:$0xff]
      %v55 = vld [vmem:[%s2] sm:$0xf]
      %v57 = vperm.slane %v55, 0
      %v58 = vperm.slane %v55, 1
      %v59 = vperm.slane %v55, 2
      %v60 = vperm.slane %v55, 3
      %v67 = vlaneseq
      %v68 = vand.u32 %v67, 127
      %v69 = vperm.slane %v51, %v68
      %v70 = vperm.slane %v52, %v68
      %vm71 = vcmask 1041409
      %v72 = vsel %vm71, %v70, %v69
      %75 = vst [vmem:[#allocation1] ss:$2 sm:$0xff] %v53
      %s76 = scalar_lea.vmem [#allocation1], 16
      %77 = vst [vmem:[%s76] ss:$2 sm:$0xff] %v54
      %v78 = vld.sshfl [vmem:[#allocation1] sm:$0xff pattern:$0x75316420]
      %v79 = vld.sshfl [vmem:[#allocation1 + $0x8] sm:$0xff pattern:$0x75316420]
      %v80 = vld.sshfl [vmem:[#allocation1 + $0x10] sm:$0xff pattern:$0x75316420]
      %v81 = vld.sshfl [vmem:[#allocation1 + $0x18] sm:$0xff pattern:$0x75316420]
      %vm82 = vcmask 31744
      %v83 = vsel %vm82, %v72, 0
      %v85 = vsel %vm44, %v78, 0
      %v87 = vsel %vm44, %v79, 0
      %v89 = vsel %vm44, %v80, 0
      %v91 = vsel %vm44, %v81, 0
      %93 = vmatpush.msra.mxu0 0.0
      %94 = vmatpush.msra.mxu0 0.0
      %95 = vmatpush.msra.mxu0 0.0
      %96 = vmatpush.msra.mxu0 0.0
      %97 = vmatpush.msra.mxu0 0.0
      %98 = vmatpush.msra.mxu0 0.0
      %99 = vmatpush.msra.mxu0 0.0
      %100 = vmatpush.msra.mxu0 0.0
      %101 = vmatpush.msra.mxu0 0.0
      %102 = vmatpush.msra.mxu0 0.0
      %103 = vmatpush.msra.mxu0 0.0
      %104 = vmatpush.msra.mxu0 0.0
      %105 = vmatpush.msra.mxu0 0.0
      %106 = vmatpush.msra.mxu0 0.0
      %107 = vmatpush.msra.mxu0 0.0
      %108 = vmatpush.msra.mxu0 %v85
      %109 = vmatmul.f32.gmra.mxu0 %v83
      %v110 = vpop.f32.mrf.mxu0
      %v111 = vadd.f32 %v57, %v110
      %112 = vdwg.mxu0
      %113 = vmatpush.msra.mxu0 0.0
      %114 = vmatpush.msra.mxu0 0.0
      %115 = vmatpush.msra.mxu0 0.0
      %116 = vmatpush.msra.mxu0 0.0
      %117 = vmatpush.msra.mxu0 0.0
      %118 = vmatpush.msra.mxu0 0.0
      %119 = vmatpush.msra.mxu0 0.0
      %120 = vmatpush.msra.mxu0 0.0
      %121 = vmatpush.msra.mxu0 0.0
      %122 = vmatpush.msra.mxu0 0.0
      %123 = vmatpush.msra.mxu0 0.0
      %124 = vmatpush.msra.mxu0 0.0
      %125 = vmatpush.msra.mxu0 0.0
      %126 = vmatpush.msra.mxu0 0.0
      %127 = vmatpush.msra.mxu0 0.0
      %128 = vmatpush.msra.mxu0 %v87
      %129 = vmatmul.f32.gmra.mxu0 %v83
      %v130 = vpop.f32.mrf.mxu0
      %v131 = vadd.f32 %v58, %v130
      %132 = vdwg.mxu0
      %133 = vmatpush.msra.mxu0 0.0
      %134 = vmatpush.msra.mxu0 0.0
      %135 = vmatpush.msra.mxu0 0.0
      %136 = vmatpush.msra.mxu0 0.0
      %137 = vmatpush.msra.mxu0 0.0
      %138 = vmatpush.msra.mxu0 0.0
      %139 = vmatpush.msra.mxu0 0.0
      %140 = vmatpush.msra.mxu0 0.0
      %141 = vmatpush.msra.mxu0 0.0
      %142 = vmatpush.msra.mxu0 0.0
      %143 = vmatpush.msra.mxu0 0.0
      %144 = vmatpush.msra.mxu0 0.0
      %145 = vmatpush.msra.mxu0 0.0
      %146 = vmatpush.msra.mxu0 0.0
      %147 = vmatpush.msra.mxu0 0.0
      %148 = vmatpush.msra.mxu0 %v89
      %149 = vmatmul.f32.gmra.mxu0 %v83
      %v150 = vpop.f32.mrf.mxu0
      %v151 = vadd.f32 %v59, %v150
      %152 = vdwg.mxu0
      %153 = vmatpush.msra.mxu0 0.0
      %154 = vmatpush.msra.mxu0 0.0
      %155 = vmatpush.msra.mxu0 0.0
      %156 = vmatpush.msra.mxu0 0.0
      %157 = vmatpush.msra.mxu0 0.0
      %158 = vmatpush.msra.mxu0 0.0
      %159 = vmatpush.msra.mxu0 0.0
      %160 = vmatpush.msra.mxu0 0.0
      %161 = vmatpush.msra.mxu0 0.0
      %162 = vmatpush.msra.mxu0 0.0
      %163 = vmatpush.msra.mxu0 0.0
      %164 = vmatpush.msra.mxu0 0.0
      %165 = vmatpush.msra.mxu0 0.0
      %166 = vmatpush.msra.mxu0 0.0
      %167 = vmatpush.msra.mxu0 0.0
      %168 = vmatpush.msra.mxu0 %v91
      %169 = vmatmul.f32.gmra.mxu0 %v83
      %v170 = vpop.f32.mrf.mxu0
      %v171 = vadd.f32 %v60, %v170
      %172 = vdwg.mxu0
      %v173 = vmax.f32 %v111, 0.0
      %v174 = vmax.f32 %v131, 0.0
      %v175 = vmax.f32 %v151, 0.0
      %v176 = vmax.f32 %v171, 0.0
      %v177 = vld [vmem:[%s3] sm:$0xff]
      %v178 = vld [vmem:[%s3 + $0x8] sm:$0xff]
      %v179 = vld [vmem:[%s3 + $0x10] sm:$0xff]
      %v180 = vld [vmem:[%s3 + $0x18] sm:$0xff]
      %v181 = vld [vmem:[%s3 + $0x20] sm:$0xff]
      %v182 = vld [vmem:[%s3 + $0x28] sm:$0xff]
      %v183 = vld [vmem:[%s3 + $0x30] sm:$0xff]
      %v184 = vld [vmem:[%s3 + $0x38] sm:$0xff]
      %v185 = vld [vmem:[%s3 + $0x40] sm:$0xff]
      %v186 = vld [vmem:[%s3 + $0x48] sm:$0xff]
      %v187 = vld [vmem:[%s3 + $0x50] sm:$0xff]
      %v188 = vld [vmem:[%s3 + $0x58] sm:$0xff]
      %v189 = vld [vmem:[%s3 + $0x60] sm:$0xff]
      %v190 = vld [vmem:[%s3 + $0x68] sm:$0xff]
      %v191 = vld [vmem:[%s3 + $0x70] sm:$0xff]
      %v192 = vld [vmem:[%s3 + $0x78] sm:$0xff]
      %v193 = vld [vmem:[%s3 + $0x80] sm:$0xff]
      %v194 = vld [vmem:[%s3 + $0x88] sm:$0xff]
      %v195 = vld [vmem:[%s3 + $0x90] sm:$0xff]
      %v196 = vld [vmem:[%s3 + $0x98] sm:$0xff]
      %v197 = vld [vmem:[%s3 + $0xa0] sm:$0xff]
      %v198 = vld [vmem:[%s3 + $0xa8] sm:$0xff]
      %v199 = vld [vmem:[%s3 + $0xb0] sm:$0xff]
      %v200 = vld [vmem:[%s3 + $0xb8] sm:$0xff]
      %v201 = vld [vmem:[%s3 + $0xc0] sm:$0xff]
      %v202 = vld [vmem:[%s3 + $0xc8] sm:$0xff]
      %v203 = vld [vmem:[%s3 + $0xd0] sm:$0xff]
      %v204 = vld [vmem:[%s3 + $0xd8] sm:$0xff]
      %v205 = vld [vmem:[%s3 + $0xe0] sm:$0xff]
      %v206 = vld [vmem:[%s3 + $0xe8] sm:$0xff]
      %v207 = vld [vmem:[%s3 + $0xf0] sm:$0xff]
      %v208 = vld [vmem:[%s3 + $0xf8] sm:$0xff]
      %v209 = vld [vmem:[%s3 + $0x100] sm:$0xff]
      %v210 = vld [vmem:[%s3 + $0x108] sm:$0xff]
      %v211 = vld [vmem:[%s3 + $0x110] sm:$0xff]
      %v212 = vld [vmem:[%s3 + $0x118] sm:$0xff]
      %v213 = vld [vmem:[%s3 + $0x120] sm:$0xff]
      %v214 = vld [vmem:[%s3 + $0x128] sm:$0xff]
      %v215 = vld [vmem:[%s3 + $0x130] sm:$0xff]
      %v216 = vld [vmem:[%s3 + $0x138] sm:$0xff]
      %v217 = vld [vmem:[%s3 + $0x140] sm:$0xff]
      %v218 = vld [vmem:[%s3 + $0x148] sm:$0xff]
      %v219 = vld [vmem:[%s3 + $0x150] sm:$0xff]
      %v220 = vld [vmem:[%s3 + $0x158] sm:$0xff]
      %v221 = vld [vmem:[%s3 + $0x160] sm:$0xff]
      %v222 = vld [vmem:[%s3 + $0x168] sm:$0xff]
      %v223 = vld [vmem:[%s3 + $0x170] sm:$0xff]
      %v224 = vld [vmem:[%s3 + $0x178] sm:$0xff]
      %v225 = vld [vmem:[%s3 + $0x180] sm:$0xff]
      %v226 = vld [vmem:[%s3 + $0x188] sm:$0xff]
      %v227 = vld [vmem:[%s3 + $0x190] sm:$0xff]
      %v228 = vld [vmem:[%s3 + $0x198] sm:$0xff]
      %v229 = vld [vmem:[%s3 + $0x1a0] sm:$0xff]
      %v230 = vld [vmem:[%s3 + $0x1a8] sm:$0xff]
      %v231 = vld [vmem:[%s3 + $0x1b0] sm:$0xff]
      %v232 = vld [vmem:[%s3 + $0x1b8] sm:$0xff]
      %v233 = vld [vmem:[%s3 + $0x1c0] sm:$0xff]
      %v234 = vld [vmem:[%s3 + $0x1c8] sm:$0xff]
      %v235 = vld [vmem:[%s3 + $0x1d0] sm:$0xff]
      %v236 = vld [vmem:[%s3 + $0x1d8] sm:$0xff]
      %v237 = vld [vmem:[%s3 + $0x1e0] sm:$0xff]
      %v238 = vld [vmem:[%s3 + $0x1e8] sm:$0xff]
      %v239 = vld [vmem:[%s3 + $0x1f0] sm:$0xff]
      %v240 = vld [vmem:[%s3 + $0x1f8] sm:$0xff]
      %v241 = vld [vmem:[%s4] sm:$0x1]
      %v243 = vperm.slane %v241, 0
      %245 = vmatpush.msra.mxu0 %v192
      %246 = vmatpush.msra.mxu0 %v191
      %247 = vmatpush.msra.mxu0 %v190
      %248 = vmatpush.msra.mxu0 %v189
      %249 = vmatpush.msra.mxu0 %v188
      %250 = vmatpush.msra.mxu0 %v187
      %251 = vmatpush.msra.mxu0 %v186
      %252 = vmatpush.msra.mxu0 %v185
      %253 = vmatpush.msra.mxu0 %v184
      %254 = vmatpush.msra.mxu0 %v183
      %255 = vmatpush.msra.mxu0 %v182
      %256 = vmatpush.msra.mxu0 %v181
      %257 = vmatpush.msra.mxu0 %v180
      %258 = vmatpush.msra.mxu0 %v179
      %259 = vmatpush.msra.mxu0 %v178
      %260 = vmatpush.msra.mxu0 %v177
      %261 = vmatmul.f32.gmra.mxu0 %v173
      %v262 = vpop.f32.mrf.mxu0
      %v263 = vadd.f32 %v243, %v262
      %264 = vdwg.mxu0
      %265 = vmatpush.msra.mxu0 %v208
      %266 = vmatpush.msra.mxu0 %v207
      %267 = vmatpush.msra.mxu0 %v206
      %268 = vmatpush.msra.mxu0 %v205
      %269 = vmatpush.msra.mxu0 %v204
      %270 = vmatpush.msra.mxu0 %v203
      %271 = vmatpush.msra.mxu0 %v202
      %272 = vmatpush.msra.mxu0 %v201
      %273 = vmatpush.msra.mxu0 %v200
      %274 = vmatpush.msra.mxu0 %v199
      %275 = vmatpush.msra.mxu0 %v198
      %276 = vmatpush.msra.mxu0 %v197
      %277 = vmatpush.msra.mxu0 %v196
      %278 = vmatpush.msra.mxu0 %v195
      %279 = vmatpush.msra.mxu0 %v194
      %280 = vmatpush.msra.mxu0 %v193
      %281 = vmatmul.f32.gmra.mxu0 %v174
      %v282 = vpop.f32.mrf.mxu0
      %v283 = vadd.f32 %v263, %v282
      %284 = vdwg.mxu0
      %285 = vmatpush.msra.mxu0 %v224
      %286 = vmatpush.msra.mxu0 %v223
      %287 = vmatpush.msra.mxu0 %v222
      %288 = vmatpush.msra.mxu0 %v221
      %289 = vmatpush.msra.mxu0 %v220
      %290 = vmatpush.msra.mxu0 %v219
      %291 = vmatpush.msra.mxu0 %v218
      %292 = vmatpush.msra.mxu0 %v217
      %293 = vmatpush.msra.mxu0 %v216
      %294 = vmatpush.msra.mxu0 %v215
      %295 = vmatpush.msra.mxu0 %v214
      %296 = vmatpush.msra.mxu0 %v213
      %297 = vmatpush.msra.mxu0 %v212
      %298 = vmatpush.msra.mxu0 %v211
      %299 = vmatpush.msra.mxu0 %v210
      %300 = vmatpush.msra.mxu0 %v209
      %301 = vmatmul.f32.gmra.mxu0 %v175
      %v302 = vpop.f32.mrf.mxu0
      %v303 = vadd.f32 %v283, %v302
      %304 = vdwg.mxu0
      %305 = vmatpush.msra.mxu0 %v240
      %306 = vmatpush.msra.mxu0 %v239
      %307 = vmatpush.msra.mxu0 %v238
      %308 = vmatpush.msra.mxu0 %v237
      %309 = vmatpush.msra.mxu0 %v236
      %310 = vmatpush.msra.mxu0 %v235
      %311 = vmatpush.msra.mxu0 %v234
      %312 = vmatpush.msra.mxu0 %v233
      %313 = vmatpush.msra.mxu0 %v232
      %314 = vmatpush.msra.mxu0 %v231
      %315 = vmatpush.msra.mxu0 %v230
      %316 = vmatpush.msra.mxu0 %v229
      %317 = vmatpush.msra.mxu0 %v228
      %318 = vmatpush.msra.mxu0 %v227
      %319 = vmatpush.msra.mxu0 %v226
      %320 = vmatpush.msra.mxu0 %v225
      %321 = vmatmul.f32.gmra.mxu0 %v176
      %v322 = vpop.f32.mrf.mxu0
      %v323 = vadd.f32 %v303, %v322
      %324 = vdwg.mxu0
      %vm325 = vcmask 254976
      %326 = vst.msk [vmem:[#allocation3] sm:$0x3] %vm325, %v323
    $region29: #{tpu_custom_call.1} parent=1 // pred_fallthru
      _
    // Predicated region
    $region30: #{tpu_custom_call.1} parent=1 // pred_check
      _
    $region31: #{tpu_custom_call.1} parent=1 // pred_check_branch
      %328 = sbr.rel (0) target = $region33
    $region32: #{tpu_custom_call.1} parent=1 // pred_region
      %330 = vsyncadd [#allocation4], 0
      %s332 = sshll.u32 [#allocation3], 4
      %s333 = int_to_ptr.vmem [resolvable:$true] %s332
      %s334 = sshll.u32 %s5, 4
      %s335 = int_to_ptr.hbm [resolvable:$true] %s334
      %337 = dma.vmem_to_hbm [thread:$0]  %s333, 32, %s335, [#allocation4]
    $region33: #{tpu_custom_call.1} parent=1 // pred_fallthru
      _
    // Predicated region
    $region34: #{tpu_custom_call.1} parent=1 // pred_check
      _
    $region35: #{tpu_custom_call.1} parent=1 // pred_check_branch
      %339 = sbr.rel (0) target = $region37
    $region36: #{tpu_custom_call.1} parent=1 // pred_region
      %341 = dma.done [#allocation4], 32
    $region37: #{tpu_custom_call.1} parent=1 // pred_fallthru
      _
    %342 = vsyncpa [#allocation4], 1

</llo_original>
